<compile_context>
chip_gen: v6e
topology: v6e:2x2x1
jax: 0.10.0
libtpu: 0.0.40
codegen_flags: <defaults>
</compile_context>

<pallas_src>
import jax
import jax.numpy as jnp
from jax.experimental import pallas as pl
from jax.experimental.pallas import tpu as pltpu

BN_EPS = 1e-5
SUB = 8                        # sublane multiple
VMEM_BUDGET_BYTES = 24 << 20   # conservative across v5e/v6e/v7x scoped defaults


def _round_up(x, m):
    return ((x + m - 1) // m) * m


def _make_fused_mlp_kernel(sizes, dpad):
    """Whole MLP in one gridless program; all operands resident in VMEM.

    Ref layout: (x, w_slab, vec_slab, out)
      w_slab  : (L, dpad, dpad)     w_slab[i, :in_i, :out_i] = W_i, zeros elsewhere
      vec_slab: (2*H+1, 1, dpad)    rows [2i]=gamma_i, [2i+1]=beta_i, [-1]=b_last
    """
    num_layers = len(sizes) - 1
    num_hidden = num_layers - 1
    k0 = _round_up(sizes[0], SUB)
    f_last = sizes[-1]

    def kernel(x_ref, w_ref, v_ref, o_ref):
        n = x_ref.shape[0]
        inv_n = jnp.float32(1.0 / n)
        x = x_ref[...]                                             # (N, k0)
        for i in range(num_hidden):
            k_rows = k0 if i == 0 else dpad
            w = w_ref[i, :k_rows, :]                               # (k_rows, dpad)
            # Linear (hidden bias dropped: exactly cancelled by BN mean sub).
            y = jnp.dot(x, w, preferred_element_type=jnp.float32)  # (N, dpad)
            # BatchNorm1d, training mode, single-pass batch statistics.
            s1 = jnp.sum(y, axis=0, keepdims=True)                 # (1, dpad)
            s2 = jnp.sum(y * y, axis=0, keepdims=True)             # (1, dpad)
            mean = s1 * inv_n
            var = jnp.maximum(s2 * inv_n - mean * mean, 0.0)       # clamp >= 0
            inv_std = jax.lax.rsqrt(var + jnp.float32(BN_EPS))
            gamma = v_ref[2 * i]                                   # (1, dpad)
            beta = v_ref[2 * i + 1]                                # (1, dpad)
            scale = gamma * inv_std
            shift = beta - mean * scale
            # Fused BN-affine + ReLU. Padded lanes: gamma=beta=0 -> stay 0.
            x = jnp.maximum(y * scale + shift, 0.0)
        # Final Linear (with bias, no BN/ReLU); store at true output width.
        k_rows = k0 if num_hidden == 0 else dpad
        w = w_ref[num_hidden, :k_rows, :]
        y = jnp.dot(x, w, preferred_element_type=jnp.float32)      # (N, dpad)
        b = v_ref[2 * num_hidden]                                  # (1, dpad)
        o_ref[...] = y[:, :f_last] + b[:, :f_last]

    return kernel


def make_forward(layer_sizes):
    """Build a jitted forward(w_slab, vec_slab, x) for fixed layer_sizes."""
    sizes = tuple(int(s) for s in layer_sizes)
    num_layers = len(sizes) - 1
    num_hidden = num_layers - 1
    dpad = _round_up(max(sizes), SUB)
    k0 = _round_up(sizes[0], SUB)
    f_last = sizes[-1]

    slab_bytes = 4 * (num_layers * dpad * dpad + (2 * num_hidden + 1) * dpad)
    # TODO(synk): stream weights with a per-layer grid / pltpu.emit_pipeline
    # instead of keeping everything VMEM-resident once this starts to bind.
    assert slab_bytes < VMEM_BUDGET_BYTES, "MLP too large for fused VMEM kernel"

    kernel = _make_fused_mlp_kernel(sizes, dpad)

    def fwd(w_slab, vec_slab, x):
        n = x.shape[0]
        if x.shape[1] != k0:  # only if in_features is not a sublane multiple
            x = jnp.pad(x, ((0, 0), (0, k0 - x.shape[1])))

        # Advisory cost estimate from logical (unpadded) dims.
        flops = 2 * n * sum(sizes[i] * sizes[i + 1] for i in range(num_layers))
        transcendentals = sum(sizes[i + 1] for i in range(num_hidden))
        bytes_accessed = 4 * (
            n * sizes[0]
            + sum(sizes[i] * sizes[i + 1] for i in range(num_layers))
            + 2 * sum(sizes[i + 1] for i in range(num_hidden))
            + sizes[-1]
            + n * sizes[-1])

        return pl.pallas_call(
            kernel,
            out_shape=jax.ShapeDtypeStruct((n, f_last), jnp.float32),
            in_specs=[pl.BlockSpec(memory_space=pltpu.MemorySpace.VMEM)] * 3,
            out_specs=pl.BlockSpec(memory_space=pltpu.MemorySpace.VMEM),
            cost_estimate=pl.CostEstimate(
                flops=flops,
                transcendentals=transcendentals,
                bytes_accessed=bytes_accessed),
        )(x, w_slab, vec_slab)

    return jax.jit(fwd)


def prepare_params(params):
    """One-time packing of (w, b, gamma, beta) params into two VMEM slabs.

    Kept out of the per-call path: the padding/stacking cost is paid once.
    Zero-initialized slabs guarantee that padded weight rows/cols and padded
    gamma/beta/bias lanes are exactly zero (padded-lane invariant).
    """
    sizes = [params[0][0].shape[0]] + [w.shape[1] for (w, _, _, _) in params]
    num_layers = len(params)
    num_hidden = num_layers - 1
    dpad = _round_up(max(sizes), SUB)

    w_slab = jnp.zeros((num_layers, dpad, dpad), jnp.float32)
    for i, (w, _, _, _) in enumerate(params):
        w_slab = w_slab.at[i, :w.shape[0], :w.shape[1]].set(w)

    vec_slab = jnp.zeros((2 * num_hidden + 1, 1, dpad), jnp.float32)
    for i, (_, _, gamma, beta) in enumerate(params[:-1]):
        vec_slab = vec_slab.at[2 * i, 0, :gamma.shape[-1]].set(gamma.reshape(-1))
        vec_slab = vec_slab.at[2 * i + 1, 0, :beta.shape[-1]].set(beta.reshape(-1))
    b_last = params[-1][1]
    vec_slab = vec_slab.at[2 * num_hidden, 0, :b_last.shape[-1]].set(
        b_last.reshape(-1))
    return w_slab, vec_slab


def init_params(key, layer_sizes):
    """Deterministic init. Linear: uniform(-1/sqrt(in), 1/sqrt(in)) like PyTorch.
    BatchNorm1d: gamma=1, beta=0."""
    params = []
    for i in range(len(layer_sizes) - 1):
        in_f, out_f = layer_sizes[i], layer_sizes[i + 1]
        key, kw, kb = jax.random.split(key, 3)
        bound = 1.0 / jnp.sqrt(jnp.float32(in_f))
        w = jax.random.uniform(kw, (in_f, out_f), jnp.float32, -bound, bound)
        b = jax.random.uniform(kb, (1, out_f), jnp.float32, -bound, bound)
        gamma = jnp.ones((1, out_f), jnp.float32)
        beta = jnp.zeros((1, out_f), jnp.float32)
        params.append((w, b, gamma, beta))
    return params


def forward_reference(params, x):
    """Pure-JAX reference matching the PyTorch module exactly (incl. the
    hidden-layer biases that train-mode BN cancels)."""
    out = x
    for (w, b, gamma, beta) in params[:-1]:
        y = out @ w + b
        mean = jnp.mean(y, axis=0, keepdims=True)
        var = jnp.mean((y - mean) ** 2, axis=0, keepdims=True)
        y_hat = (y - mean) * jax.lax.rsqrt(var + BN_EPS)
        out = jnp.maximum(gamma * y_hat + beta, 0.0)
    w, b, _, _ = params[-1]
    return out @ w + b


if __name__ == "__main__":
    layer_sizes = [32, 64, 64, 16]   # small MLP consistent with the module
    batch = 8

    key = jax.random.PRNGKey(0)
    key, kx = jax.random.split(key)
    x = jax.random.normal(kx, (batch, layer_sizes[0]), jnp.float32)

    params = init_params(key, layer_sizes)
    w_slab, vec_slab = prepare_params(params)   # one-time packing, off the hot path
    forward = make_forward(layer_sizes)

    y = forward(w_slab, vec_slab, x)
    jax.block_until_ready(y)

    assert y.shape == (batch, layer_sizes[-1])
    assert y.dtype == jnp.float32

    y_ref = forward_reference(params, x)
    assert jnp.allclose(y, y_ref, rtol=1e-2, atol=1e-2), "mismatch vs reference"

    print("KERNEL_OK")
</pallas_src>

<mosaic_0001>
module attributes {stable_mosaic.version = 11 : i64} {
  func.func @kernel(%arg0: memref<8x32xf32, #tpu.memory_space<vmem>>, %arg1: memref<3x64x64xf32, #tpu.memory_space<vmem>>, %arg2: memref<5x1x64xf32, #tpu.memory_space<vmem>>, %arg3: memref<8x16xf32, #tpu.memory_space<vmem>>) attributes {dimension_semantics = [], scalar_prefetch = 0 : i64, scratch_operands = 0 : i64, tpu.core_type = #tpu.core_type<tc>} {
    %c0 = arith.constant 0 : index
    %c0_0 = arith.constant 0 : index
    %0 = vector.load %arg0[%c0, %c0_0] : memref<8x32xf32, #tpu.memory_space<vmem>>, vector<8x32xf32>
    %c0_1 = arith.constant 0 : index
    %c0_2 = arith.constant 0 : index
    %c0_3 = arith.constant 0 : index
    %1 = vector.load %arg1[%c0_1, %c0_2, %c0_3] : memref<3x64x64xf32, #tpu.memory_space<vmem>>, vector<1x32x64xf32>
    %2 = vector.shape_cast %1 : vector<1x32x64xf32> to vector<32x64xf32>
    %cst = arith.constant dense<0.000000e+00> : vector<8x64xf32>
    %3 = tpu.matmul %0, %2, %cst {dimension_numbers = #tpu.dot_dimension_numbers<[1], [0], [0], [1], [0, 0, 1, 1], [], []>} : vector<8x32xf32>, vector<32x64xf32>, vector<8x64xf32> -> vector<8x64xf32>
    %cst_4 = arith.constant dense<0.000000e+00> : vector<64xf32>
    %4 = vector.multi_reduction <add>, %3, %cst_4 [0] : vector<8x64xf32> to vector<64xf32>
    %5 = vector.shape_cast %4 : vector<64xf32> to vector<1x64xf32>
    %6 = arith.mulf %3, %3 : vector<8x64xf32>
    %cst_5 = arith.constant dense<0.000000e+00> : vector<64xf32>
    %7 = vector.multi_reduction <add>, %6, %cst_5 [0] : vector<8x64xf32> to vector<64xf32>
    %8 = vector.shape_cast %7 : vector<64xf32> to vector<1x64xf32>
    %cst_6 = arith.constant 1.250000e-01 : f32
    %9 = vector.broadcast %cst_6 : f32 to vector<1x64xf32>
    %10 = arith.mulf %5, %9 : vector<1x64xf32>
    %cst_7 = arith.constant 1.250000e-01 : f32
    %11 = vector.broadcast %cst_7 : f32 to vector<1x64xf32>
    %12 = arith.mulf %8, %11 : vector<1x64xf32>
    %13 = arith.mulf %10, %10 : vector<1x64xf32>
    %14 = arith.subf %12, %13 : vector<1x64xf32>
    %cst_8 = arith.constant 0.000000e+00 : f32
    %15 = vector.broadcast %cst_8 : f32 to vector<1x64xf32>
    %16 = arith.maximumf %14, %15 : vector<1x64xf32>
    %cst_9 = arith.constant 9.99999974E-6 : f32
    %17 = vector.broadcast %cst_9 : f32 to vector<1x64xf32>
    %18 = arith.addf %16, %17 : vector<1x64xf32>
    %19 = math.rsqrt %18 : vector<1x64xf32>
    %c0_10 = arith.constant 0 : index
    %c0_11 = arith.constant 0 : index
    %c0_12 = arith.constant 0 : index
    %20 = vector.load %arg2[%c0_10, %c0_11, %c0_12] : memref<5x1x64xf32, #tpu.memory_space<vmem>>, vector<1x1x64xf32>
    %21 = vector.shape_cast %20 : vector<1x1x64xf32> to vector<1x64xf32>
    %c1 = arith.constant 1 : index
    %c0_13 = arith.constant 0 : index
    %c0_14 = arith.constant 0 : index
    %22 = vector.load %arg2[%c1, %c0_13, %c0_14] : memref<5x1x64xf32, #tpu.memory_space<vmem>>, vector<1x1x64xf32>
    %23 = vector.shape_cast %22 : vector<1x1x64xf32> to vector<1x64xf32>
    %24 = arith.mulf %21, %19 : vector<1x64xf32>
    %25 = arith.mulf %10, %24 : vector<1x64xf32>
    %26 = arith.subf %23, %25 : vector<1x64xf32>
    %27 = vector.broadcast %24 : vector<1x64xf32> to vector<8x64xf32>
    %28 = arith.mulf %3, %27 : vector<8x64xf32>
    %29 = vector.broadcast %26 : vector<1x64xf32> to vector<8x64xf32>
    %30 = arith.addf %28, %29 : vector<8x64xf32>
    %cst_15 = arith.constant 0.000000e+00 : f32
    %31 = vector.broadcast %cst_15 : f32 to vector<8x64xf32>
    %32 = arith.maximumf %30, %31 : vector<8x64xf32>
    %c1_16 = arith.constant 1 : index
    %c0_17 = arith.constant 0 : index
    %c0_18 = arith.constant 0 : index
    %33 = vector.load %arg1[%c1_16, %c0_17, %c0_18] : memref<3x64x64xf32, #tpu.memory_space<vmem>>, vector<1x64x64xf32>
    %34 = vector.shape_cast %33 : vector<1x64x64xf32> to vector<64x64xf32>
    %cst_19 = arith.constant dense<0.000000e+00> : vector<8x64xf32>
    %35 = tpu.matmul %32, %34, %cst_19 {dimension_numbers = #tpu.dot_dimension_numbers<[1], [0], [0], [1], [0, 0, 1, 1], [], []>} : vector<8x64xf32>, vector<64x64xf32>, vector<8x64xf32> -> vector<8x64xf32>
    %cst_20 = arith.constant dense<0.000000e+00> : vector<64xf32>
    %36 = vector.multi_reduction <add>, %35, %cst_20 [0] : vector<8x64xf32> to vector<64xf32>
    %37 = vector.shape_cast %36 : vector<64xf32> to vector<1x64xf32>
    %38 = arith.mulf %35, %35 : vector<8x64xf32>
    %cst_21 = arith.constant dense<0.000000e+00> : vector<64xf32>
    %39 = vector.multi_reduction <add>, %38, %cst_21 [0] : vector<8x64xf32> to vector<64xf32>
    %40 = vector.shape_cast %39 : vector<64xf32> to vector<1x64xf32>
    %cst_22 = arith.constant 1.250000e-01 : f32
    %41 = vector.broadcast %cst_22 : f32 to vector<1x64xf32>
    %42 = arith.mulf %37, %41 : vector<1x64xf32>
    %cst_23 = arith.constant 1.250000e-01 : f32
    %43 = vector.broadcast %cst_23 : f32 to vector<1x64xf32>
    %44 = arith.mulf %40, %43 : vector<1x64xf32>
    %45 = arith.mulf %42, %42 : vector<1x64xf32>
    %46 = arith.subf %44, %45 : vector<1x64xf32>
    %cst_24 = arith.constant 0.000000e+00 : f32
    %47 = vector.broadcast %cst_24 : f32 to vector<1x64xf32>
    %48 = arith.maximumf %46, %47 : vector<1x64xf32>
    %cst_25 = arith.constant 9.99999974E-6 : f32
    %49 = vector.broadcast %cst_25 : f32 to vector<1x64xf32>
    %50 = arith.addf %48, %49 : vector<1x64xf32>
    %51 = math.rsqrt %50 : vector<1x64xf32>
    %c2 = arith.constant 2 : index
    %c0_26 = arith.constant 0 : index
    %c0_27 = arith.constant 0 : index
    %52 = vector.load %arg2[%c2, %c0_26, %c0_27] : memref<5x1x64xf32, #tpu.memory_space<vmem>>, vector<1x1x64xf32>
    %53 = vector.shape_cast %52 : vector<1x1x64xf32> to vector<1x64xf32>
    %c3 = arith.constant 3 : index
    %c0_28 = arith.constant 0 : index
    %c0_29 = arith.constant 0 : index
    %54 = vector.load %arg2[%c3, %c0_28, %c0_29] : memref<5x1x64xf32, #tpu.memory_space<vmem>>, vector<1x1x64xf32>
    %55 = vector.shape_cast %54 : vector<1x1x64xf32> to vector<1x64xf32>
    %56 = arith.mulf %53, %51 : vector<1x64xf32>
    %57 = arith.mulf %42, %56 : vector<1x64xf32>
    %58 = arith.subf %55, %57 : vector<1x64xf32>
    %59 = vector.broadcast %56 : vector<1x64xf32> to vector<8x64xf32>
    %60 = arith.mulf %35, %59 : vector<8x64xf32>
    %61 = vector.broadcast %58 : vector<1x64xf32> to vector<8x64xf32>
    %62 = arith.addf %60, %61 : vector<8x64xf32>
    %cst_30 = arith.constant 0.000000e+00 : f32
    %63 = vector.broadcast %cst_30 : f32 to vector<8x64xf32>
    %64 = arith.maximumf %62, %63 : vector<8x64xf32>
    %c2_31 = arith.constant 2 : index
    %c0_32 = arith.constant 0 : index
    %c0_33 = arith.constant 0 : index
    %65 = vector.load %arg1[%c2_31, %c0_32, %c0_33] : memref<3x64x64xf32, #tpu.memory_space<vmem>>, vector<1x64x64xf32>
    %66 = vector.shape_cast %65 : vector<1x64x64xf32> to vector<64x64xf32>
    %cst_34 = arith.constant dense<0.000000e+00> : vector<8x64xf32>
    %67 = tpu.matmul %64, %66, %cst_34 {dimension_numbers = #tpu.dot_dimension_numbers<[1], [0], [0], [1], [0, 0, 1, 1], [], []>} : vector<8x64xf32>, vector<64x64xf32>, vector<8x64xf32> -> vector<8x64xf32>
    %c4 = arith.constant 4 : index
    %c0_35 = arith.constant 0 : index
    %c0_36 = arith.constant 0 : index
    %68 = vector.load %arg2[%c4, %c0_35, %c0_36] : memref<5x1x64xf32, #tpu.memory_space<vmem>>, vector<1x1x64xf32>
    %69 = vector.shape_cast %68 : vector<1x1x64xf32> to vector<1x64xf32>
    %70 = vector.extract_strided_slice %67 {offsets = [0, 0], sizes = [8, 16], strides = [1, 1]} : vector<8x64xf32> to vector<8x16xf32>
    %71 = vector.extract_strided_slice %69 {offsets = [0, 0], sizes = [1, 16], strides = [1, 1]} : vector<1x64xf32> to vector<1x16xf32>
    %72 = vector.broadcast %71 : vector<1x16xf32> to vector<8x16xf32>
    %73 = arith.addf %70, %72 : vector<8x16xf32>
    %c0_37 = arith.constant 0 : index
    %c0_38 = arith.constant 0 : index
    %74 = vector.load %arg3[%c0_37, %c0_38] : memref<8x16xf32, #tpu.memory_space<vmem>>, vector<8x16xf32>
    tpu.vector_store %arg3[%c0_37, %c0_38], %73 {strides = array<i32>} : memref<8x16xf32, #tpu.memory_space<vmem>>, vector<8x16xf32>,
    return
  }
}

</mosaic_0001>

<llo_original>
// kernel: fwd.1
$region0: #{fwd.1}
  #allocation0 [shape = 'u32[]', space=smem, size = 0x4, offset = 0x4, fixed_abs, tag = 'smem constant byte address 0x4 - core index']
  #allocation1 [shape = 'u32[144,128]{1,0:T(1,128)}', space=vmem, size = 0x12000, scoped, tag = 'internal scratch']
  %s0 = inlined_call_operand.hbm [shape: f32[8,32], index: 0, kind: input, shape index: {}]
  %s1 = inlined_call_operand.hbm [shape: f32[3,64,64], index: 1, kind: input, shape index: {}]
  %s2 = inlined_call_operand.hbm [shape: f32[5,1,64], index: 2, kind: input, shape index: {}]
  %s3 = inlined_call_operand.hbm [shape: f32[8,16], index: 3, kind: output, shape index: {}]
  %s4 = sld [smem:[#allocation0]]
  $region34: #{fwd.1} parent=0
    _
  %s6 = ssub.s32 1, %s4
  %s7 = scalar_select 0, %s6, %s4
  $region1: #{fwd.1} parent=0
    #allocation2 [shape = 'u8[4096]{0}', space=vmem, size = 0x1000, scoped, tag = 'input window, operand 0, single buffered']
    #allocation3 [shape = 's32[1]{0}', space=sflag, size = 0x4, scoped, tag = 'scoped memory for fwd.1']
    #allocation4 [shape = 's32[1]{0}', space=sflag, size = 0x4, scoped, tag = 'scoped memory for fwd.1']
    #allocation5 [shape = 'u8[98304]{0}', space=vmem, size = 0x18000, scoped, tag = 'input window, operand 1, single buffered']
    #allocation6 [shape = 's32[1]{0}', space=sflag, size = 0x4, scoped, tag = 'scoped memory for fwd.1']
    #allocation7 [shape = 'u8[2560]{0}', space=vmem, size = 0xc00, scoped, tag = 'input window, operand 2, single buffered']
    #allocation8 [shape = 'u8[4096]{0}', space=vmem, size = 0x1000, scoped, tag = 'output window, operand 0, single buffered']
    %8 = vsyncpa [#allocation3], 0
    %9 = vsyncpa [#allocation6], 0
    %10 = vsyncpa [#allocation4], 0
    // Predicated region
    $region2: #{fwd.1} parent=1 // pred_check
      _
    $region3: #{fwd.1} parent=1 // pred_check_branch
      %12 = sbr.rel (0) target = $region5
    $region4: #{fwd.1} parent=1 // pred_region
      %s14 = ssub.s32 128, 128
      %15 = vsyncadd [#allocation3], %s14
      %s17 = sshll.u32 [#allocation2], 4
      %s18 = int_to_ptr.vmem [resolvable:$true] %s17
      %20 = dma.hbm_to_vmem [thread:$0]  %s0, 128, %s18, [#allocation3]
    $region5: #{fwd.1} parent=1 // pred_fallthru
      _
    // Predicated region
    $region6: #{fwd.1} parent=1 // pred_check
      _
    $region7: #{fwd.1} parent=1 // pred_check_branch
      %22 = sbr.rel (0) target = $region9
    $region8: #{fwd.1} parent=1 // pred_region
      %s24 = ssub.s32 3072, 3072
      %25 = vsyncadd [#allocation6], %s24
      %s26 = sshll.u32 [#allocation5], 4
      %s27 = int_to_ptr.vmem [resolvable:$true] %s26
      %32 = dma.hbm_to_vmem [thread:$0]  %s1, 3072, %s27, [#allocation6], 128, 128, 8
    $region9: #{fwd.1} parent=1 // pred_fallthru
      _
    // Predicated region
    $region10: #{fwd.1} parent=1 // pred_check
      _
    $region11: #{fwd.1} parent=1 // pred_check_branch
      %34 = sbr.rel (0) target = $region13
    $region12: #{fwd.1} parent=1 // pred_region
      %s36 = ssub.s32 80, 80
      %37 = vsyncadd [#allocation6], %s36
      %s38 = sshll.u32 [#allocation7], 4
      %s39 = int_to_ptr.vmem [resolvable:$true] %s38
      %44 = dma.hbm_to_vmem [thread:$0]  %s2, 80, %s39, [#allocation6], 16, 16, 1
    $region13: #{fwd.1} parent=1 // pred_fallthru
      _
    // Predicated region
    $region14: #{fwd.1} parent=1 // pred_check
      _
    $region15: #{fwd.1} parent=1 // pred_check_branch
      %46 = sbr.rel (0) target = $region17
    $region16: #{fwd.1} parent=1 // pred_region
      %47 = dma.done [#allocation3], 128
    $region17: #{fwd.1} parent=1 // pred_fallthru
      _
    // Predicated region
    $region18: #{fwd.1} parent=1 // pred_check
      _
    $region19: #{fwd.1} parent=1 // pred_check_branch
      %49 = sbr.rel (0) target = $region21
    $region20: #{fwd.1} parent=1 // pred_region
      %50 = dma.done [#allocation6], 3072
    $region21: #{fwd.1} parent=1 // pred_fallthru
      _
    // Predicated region
    $region22: #{fwd.1} parent=1 // pred_check
      _
    $region23: #{fwd.1} parent=1 // pred_check_branch
      %52 = sbr.rel (0) target = $region25
    $region24: #{fwd.1} parent=1 // pred_region
      %53 = dma.done [#allocation6], 80
    $region25: #{fwd.1} parent=1 // pred_fallthru
      _
    %v54 = vld [vmem:[#allocation2] sm:$0xff]
    %v55 = vld [vmem:[#allocation5] sm:$0xff]
    %v56 = vld [vmem:[#allocation5 + $0x8] sm:$0xff]
    %v57 = vld [vmem:[#allocation5 + $0x10] sm:$0xff]
    %v58 = vld [vmem:[#allocation5 + $0x18] sm:$0xff]
    %vm59 = vcmask 261120
    %v61 = vsel %vm59, %v54, 0
    %63 = vmatprep.subr.mxu0 0.0
    %64 = vmatpush1.msra.mxu0 0.0
    %65 = vmatprep.subr.mxu0 0.0
    %66 = vmatpush1.msra.mxu0 0.0
    %67 = vmatprep.subr.mxu0 0.0
    %68 = vmatpush1.msra.mxu0 0.0
    %69 = vmatprep.subr.mxu0 0.0
    %70 = vmatpush1.msra.mxu0 0.0
    %71 = vmatprep.subr.mxu0 0.0
    %72 = vmatpush1.msra.mxu0 0.0
    %73 = vmatprep.subr.mxu0 0.0
    %74 = vmatpush1.msra.mxu0 0.0
    %75 = vmatprep.subr.mxu0 0.0
    %76 = vmatpush1.msra.mxu0 0.0
    %77 = vmatprep.subr.mxu0 0.0
    %78 = vmatpush1.msra.mxu0 0.0
    %79 = vmatprep.subr.mxu0 0.0
    %80 = vmatpush1.msra.mxu0 0.0
    %81 = vmatprep.subr.mxu0 0.0
    %82 = vmatpush1.msra.mxu0 0.0
    %83 = vmatprep.subr.mxu0 0.0
    %84 = vmatpush1.msra.mxu0 0.0
    %85 = vmatprep.subr.mxu0 0.0
    %86 = vmatpush1.msra.mxu0 0.0
    %87 = vmatprep.subr.mxu0 0.0
    %88 = vmatpush1.msra.mxu0 %v58
    %89 = vmatprep.subr.mxu0 0.0
    %90 = vmatpush1.msra.mxu0 %v57
    %91 = vmatprep.subr.mxu0 0.0
    %92 = vmatpush1.msra.mxu0 %v56
    %93 = vmatprep.subr.mxu0 0.0
    %94 = vmatpush1.msra.mxu0 %v55
    %95 = vmatprep.subr.mxu0 0.0
    %96 = vmatpush2.msra.mxu0 0.0
    %97 = vmatprep.subr.mxu0 0.0
    %98 = vmatpush2.msra.mxu0 0.0
    %99 = vmatprep.subr.mxu0 0.0
    %100 = vmatpush2.msra.mxu0 0.0
    %101 = vmatprep.subr.mxu0 0.0
    %102 = vmatpush2.msra.mxu0 0.0
    %103 = vmatprep.subr.mxu0 0.0
    %104 = vmatpush2.msra.mxu0 0.0
    %105 = vmatprep.subr.mxu0 0.0
    %106 = vmatpush2.msra.mxu0 0.0
    %107 = vmatprep.subr.mxu0 0.0
    %108 = vmatpush2.msra.mxu0 0.0
    %109 = vmatprep.subr.mxu0 0.0
    %110 = vmatpush2.msra.mxu0 0.0
    %111 = vmatprep.subr.mxu0 0.0
    %112 = vmatpush2.msra.mxu0 0.0
    %113 = vmatprep.subr.mxu0 0.0
    %114 = vmatpush2.msra.mxu0 0.0
    %115 = vmatprep.subr.mxu0 0.0
    %116 = vmatpush2.msra.mxu0 0.0
    %117 = vmatprep.subr.mxu0 0.0
    %118 = vmatpush2.msra.mxu0 0.0
    %119 = vmatprep.subr.mxu0 0.0
    %120 = vmatpush2.msra.mxu0 0.0
    %121 = vmatprep.subr.mxu0 0.0
    %122 = vmatpush2.msra.mxu0 0.0
    %123 = vmatprep.subr.mxu0 0.0
    %124 = vmatpush2.msra.mxu0 0.0
    %125 = vmatprep.subr.mxu0 0.0
    %126 = vmatpush2.msra.mxu0 0.0
    %127 = vmatprep.mubr.f32.mxu0 0.0
    %128 = vmatmul.mubr.f32.gmra.mxu0 %v61
    %v129 = vpop.f32.mrf.mxu0
    %v130 = vadd.f32 0.0, %v129
    %v131 = vpop.f32.mrf.mxu0
    %132 = vdwg.mxu0
    %vm133 = vcmask 523264
    %v134 = vsel %vm133, %v130, 0.0
    %v135 = vrot.slane %v134, 4
    %v136 = vadd.f32 %v134, %v135
    %v137 = vrot.slane %v136, 2
    %v138 = vadd.f32 %v136, %v137
    %v139 = vrot.slane %v138, 1
    %v140 = vadd.f32 %v138, %v139
    %v141 = vmul.f32 %v130, %v130
    %v142 = vsel %vm133, %v141, 0.0
    %v143 = vrot.slane %v142, 4
    %v144 = vadd.f32 %v142, %v143
    %v145 = vrot.slane %v144, 2
    %v146 = vadd.f32 %v144, %v145
    %v147 = vrot.slane %v146, 1
    %v148 = vadd.f32 %v146, %v147
    %v149 = vmul.f32 %v140, 0.125
    %v150 = vmul.f32 %v148, 0.125
    %v151 = vmul.f32 %v149, %v149
    %v152 = vsub.f32 %v150, %v151
    %v153 = vmax.f32 %v152, 0.0
    %v154 = vadd.f32 %v153, 1e-05
    %v155 = vrsqrt.pop %v154
    %v156 = vld [vmem:[#allocation7] sm:$0x1]
    %s157 = scalar_lea.vmem [#allocation7], 1
    %v158 = vld [vmem:[%s157] sm:$0x1]
    %v159 = vmul.f32 %v156, %v155
    %v160 = vmul.f32 %v149, %v159
    %v161 = vsub.f32 %v158, %v160
    %v163 = vlaneseq
    %v164 = vshrl.u32 %v163, 7
    %v165 = vsub.s32 0, %v164
    %v166 = vrot.slane %v159, %v165
    %v168 = vmul.f32 %v130, %v166
    %v170 = vlaneseq
    %v171 = vshrl.u32 %v170, 7
    %v172 = vsub.s32 0, %v171
    %v173 = vrot.slane %v161, %v172
    %v175 = vadd.f32 %v168, %v173
    %v176 = vmax.f32 %v175, 0.0
    %s177 = scalar_lea.vmem [#allocation5], 64
    %v178 = vld [vmem:[%s177] sm:$0xff]
    %v179 = vld [vmem:[%s177 + $0x8] sm:$0xff]
    %v180 = vld [vmem:[%s177 + $0x10] sm:$0xff]
    %v181 = vld [vmem:[%s177 + $0x18] sm:$0xff]
    %v182 = vld [vmem:[%s177 + $0x20] sm:$0xff]
    %v183 = vld [vmem:[%s177 + $0x28] sm:$0xff]
    %v184 = vld [vmem:[%s177 + $0x30] sm:$0xff]
    %v185 = vld [vmem:[%s177 + $0x38] sm:$0xff]
    %v187 = vsel %vm133, %v176, 0
    %189 = vmatprep.subr.mxu0 0.0
    %190 = vmatpush1.msra.mxu0 0.0
    %191 = vmatprep.subr.mxu0 0.0
    %192 = vmatpush1.msra.mxu0 0.0
    %193 = vmatprep.subr.mxu0 0.0
    %194 = vmatpush1.msra.mxu0 0.0
    %195 = vmatprep.subr.mxu0 0.0
    %196 = vmatpush1.msra.mxu0 0.0
    %197 = vmatprep.subr.mxu0 0.0
    %198 = vmatpush1.msra.mxu0 0.0
    %199 = vmatprep.subr.mxu0 0.0
    %200 = vmatpush1.msra.mxu0 0.0
    %201 = vmatprep.subr.mxu0 0.0
    %202 = vmatpush1.msra.mxu0 0.0
    %203 = vmatprep.subr.mxu0 0.0
    %204 = vmatpush1.msra.mxu0 0.0
    %205 = vmatprep.subr.mxu0 0.0
    %206 = vmatpush1.msra.mxu0 %v185
    %207 = vmatprep.subr.mxu0 0.0
    %208 = vmatpush1.msra.mxu0 %v184
    %209 = vmatprep.subr.mxu0 0.0
    %210 = vmatpush1.msra.mxu0 %v183
    %211 = vmatprep.subr.mxu0 0.0
    %212 = vmatpush1.msra.mxu0 %v182
    %213 = vmatprep.subr.mxu0 0.0
    %214 = vmatpush1.msra.mxu0 %v181
    %215 = vmatprep.subr.mxu0 0.0
    %216 = vmatpush1.msra.mxu0 %v180
    %217 = vmatprep.subr.mxu0 0.0
    %218 = vmatpush1.msra.mxu0 %v179
    %219 = vmatprep.subr.mxu0 0.0
    %220 = vmatpush1.msra.mxu0 %v178
    %221 = vmatprep.subr.mxu0 0.0
    %222 = vmatpush2.msra.mxu0 0.0
    %223 = vmatprep.subr.mxu0 0.0
    %224 = vmatpush2.msra.mxu0 0.0
    %225 = vmatprep.subr.mxu0 0.0
    %226 = vmatpush2.msra.mxu0 0.0
    %227 = vmatprep.subr.mxu0 0.0
    %228 = vmatpush2.msra.mxu0 0.0
    %229 = vmatprep.subr.mxu0 0.0
    %230 = vmatpush2.msra.mxu0 0.0
    %231 = vmatprep.subr.mxu0 0.0
    %232 = vmatpush2.msra.mxu0 0.0
    %233 = vmatprep.subr.mxu0 0.0
    %234 = vmatpush2.msra.mxu0 0.0
    %235 = vmatprep.subr.mxu0 0.0
    %236 = vmatpush2.msra.mxu0 0.0
    %237 = vmatprep.subr.mxu0 0.0
    %238 = vmatpush2.msra.mxu0 0.0
    %239 = vmatprep.subr.mxu0 0.0
    %240 = vmatpush2.msra.mxu0 0.0
    %241 = vmatprep.subr.mxu0 0.0
    %242 = vmatpush2.msra.mxu0 0.0
    %243 = vmatprep.subr.mxu0 0.0
    %244 = vmatpush2.msra.mxu0 0.0
    %245 = vmatprep.subr.mxu0 0.0
    %246 = vmatpush2.msra.mxu0 0.0
    %247 = vmatprep.subr.mxu0 0.0
    %248 = vmatpush2.msra.mxu0 0.0
    %249 = vmatprep.subr.mxu0 0.0
    %250 = vmatpush2.msra.mxu0 0.0
    %251 = vmatprep.subr.mxu0 0.0
    %252 = vmatpush2.msra.mxu0 0.0
    %253 = vmatprep.mubr.f32.mxu0 0.0
    %254 = vmatmul.mubr.f32.gmra.mxu0 %v187
    %v255 = vpop.f32.mrf.mxu0
    %v256 = vadd.f32 0.0, %v255
    %v257 = vpop.f32.mrf.mxu0
    %258 = vdwg.mxu0
    %v259 = vsel %vm133, %v256, 0.0
    %v260 = vrot.slane %v259, 4
    %v261 = vadd.f32 %v259, %v260
    %v262 = vrot.slane %v261, 2
    %v263 = vadd.f32 %v261, %v262
    %v264 = vrot.slane %v263, 1
    %v265 = vadd.f32 %v263, %v264
    %v266 = vmul.f32 %v256, %v256
    %v267 = vsel %vm133, %v266, 0.0
    %v268 = vrot.slane %v267, 4
    %v269 = vadd.f32 %v267, %v268
    %v270 = vrot.slane %v269, 2
    %v271 = vadd.f32 %v269, %v270
    %v272 = vrot.slane %v271, 1
    %v273 = vadd.f32 %v271, %v272
    %v274 = vmul.f32 %v265, 0.125
    %v275 = vmul.f32 %v273, 0.125
    %v276 = vmul.f32 %v274, %v274
    %v277 = vsub.f32 %v275, %v276
    %v278 = vmax.f32 %v277, 0.0
    %v279 = vadd.f32 %v278, 1e-05
    %v280 = vrsqrt.pop %v279
    %s281 = scalar_lea.vmem [#allocation7], 2
    %v282 = vld [vmem:[%s281] sm:$0x1]
    %s283 = scalar_lea.vmem [#allocation7], 3
    %v284 = vld [vmem:[%s283] sm:$0x1]
    %v285 = vmul.f32 %v282, %v280
    %v286 = vmul.f32 %v274, %v285
    %v287 = vsub.f32 %v284, %v286
    %v289 = vlaneseq
    %v290 = vshrl.u32 %v289, 7
    %v291 = vsub.s32 0, %v290
    %v292 = vrot.slane %v285, %v291
    %v294 = vmul.f32 %v256, %v292
    %v296 = vlaneseq
    %v297 = vshrl.u32 %v296, 7
    %v298 = vsub.s32 0, %v297
    %v299 = vrot.slane %v287, %v298
    %v301 = vadd.f32 %v294, %v299
    %v302 = vmax.f32 %v301, 0.0
    %s303 = scalar_lea.vmem [#allocation5], 128
    %v304 = vld [vmem:[%s303] sm:$0xff]
    %v305 = vld [vmem:[%s303 + $0x8] sm:$0xff]
    %v306 = vld [vmem:[%s303 + $0x10] sm:$0xff]
    %v307 = vld [vmem:[%s303 + $0x18] sm:$0xff]
    %v308 = vld [vmem:[%s303 + $0x20] sm:$0xff]
    %v309 = vld [vmem:[%s303 + $0x28] sm:$0xff]
    %v310 = vld [vmem:[%s303 + $0x30] sm:$0xff]
    %v311 = vld [vmem:[%s303 + $0x38] sm:$0xff]
    %v313 = vsel %vm133, %v302, 0
    %315 = vmatprep.subr.mxu0 0.0
    %316 = vmatpush1.msra.mxu0 0.0
    %317 = vmatprep.subr.mxu0 0.0
    %318 = vmatpush1.msra.mxu0 0.0
    %319 = vmatprep.subr.mxu0 0.0
    %320 = vmatpush1.msra.mxu0 0.0
    %321 = vmatprep.subr.mxu0 0.0
    %322 = vmatpush1.msra.mxu0 0.0
    %323 = vmatprep.subr.mxu0 0.0
    %324 = vmatpush1.msra.mxu0 0.0
    %325 = vmatprep.subr.mxu0 0.0
    %326 = vmatpush1.msra.mxu0 0.0
    %327 = vmatprep.subr.mxu0 0.0
    %328 = vmatpush1.msra.mxu0 0.0
    %329 = vmatprep.subr.mxu0 0.0
    %330 = vmatpush1.msra.mxu0 0.0
    %331 = vmatprep.subr.mxu0 0.0
    %332 = vmatpush1.msra.mxu0 %v311
    %333 = vmatprep.subr.mxu0 0.0
    %334 = vmatpush1.msra.mxu0 %v310
    %335 = vmatprep.subr.mxu0 0.0
    %336 = vmatpush1.msra.mxu0 %v309
    %337 = vmatprep.subr.mxu0 0.0
    %338 = vmatpush1.msra.mxu0 %v308
    %339 = vmatprep.subr.mxu0 0.0
    %340 = vmatpush1.msra.mxu0 %v307
    %341 = vmatprep.subr.mxu0 0.0
    %342 = vmatpush1.msra.mxu0 %v306
    %343 = vmatprep.subr.mxu0 0.0
    %344 = vmatpush1.msra.mxu0 %v305
    %345 = vmatprep.subr.mxu0 0.0
    %346 = vmatpush1.msra.mxu0 %v304
    %347 = vmatprep.subr.mxu0 0.0
    %348 = vmatpush2.msra.mxu0 0.0
    %349 = vmatprep.subr.mxu0 0.0
    %350 = vmatpush2.msra.mxu0 0.0
    %351 = vmatprep.subr.mxu0 0.0
    %352 = vmatpush2.msra.mxu0 0.0
    %353 = vmatprep.subr.mxu0 0.0
    %354 = vmatpush2.msra.mxu0 0.0
    %355 = vmatprep.subr.mxu0 0.0
    %356 = vmatpush2.msra.mxu0 0.0
    %357 = vmatprep.subr.mxu0 0.0
    %358 = vmatpush2.msra.mxu0 0.0
    %359 = vmatprep.subr.mxu0 0.0
    %360 = vmatpush2.msra.mxu0 0.0
    %361 = vmatprep.subr.mxu0 0.0
    %362 = vmatpush2.msra.mxu0 0.0
    %363 = vmatprep.subr.mxu0 0.0
    %364 = vmatpush2.msra.mxu0 0.0
    %365 = vmatprep.subr.mxu0 0.0
    %366 = vmatpush2.msra.mxu0 0.0
    %367 = vmatprep.subr.mxu0 0.0
    %368 = vmatpush2.msra.mxu0 0.0
    %369 = vmatprep.subr.mxu0 0.0
    %370 = vmatpush2.msra.mxu0 0.0
    %371 = vmatprep.subr.mxu0 0.0
    %372 = vmatpush2.msra.mxu0 0.0
    %373 = vmatprep.subr.mxu0 0.0
    %374 = vmatpush2.msra.mxu0 0.0
    %375 = vmatprep.subr.mxu0 0.0
    %376 = vmatpush2.msra.mxu0 0.0
    %377 = vmatprep.subr.mxu0 0.0
    %378 = vmatpush2.msra.mxu0 0.0
    %379 = vmatprep.mubr.f32.mxu0 0.0
    %380 = vmatmul.mubr.f32.gmra.mxu0 %v313
    %v381 = vpop.f32.mrf.mxu0
    %v382 = vadd.f32 0.0, %v381
    %v383 = vpop.f32.mrf.mxu0
    %384 = vdwg.mxu0
    %s385 = scalar_lea.vmem [#allocation7], 4
    %v386 = vld [vmem:[%s385] sm:$0x1]
    %v388 = vlaneseq
    %v389 = vshrl.u32 %v388, 7
    %v390 = vsub.s32 0, %v389
    %v391 = vrot.slane %v386, %v390
    %v393 = vadd.f32 %v382, %v391
    %vm394 = vcmask 130048
    %395 = vst.msk [vmem:[#allocation8] sm:$0xff] %vm394, %v393
    // Predicated region
    $region26: #{fwd.1} parent=1 // pred_check
      _
    $region27: #{fwd.1} parent=1 // pred_check_branch
      %397 = sbr.rel (0) target = $region29
    $region28: #{fwd.1} parent=1 // pred_region
      %s399 = ssub.s32 128, 128
      %400 = vsyncadd [#allocation4], %s399
      %s402 = sshll.u32 [#allocation8], 4
      %s403 = int_to_ptr.vmem [resolvable:$true] %s402
      %405 = dma.vmem_to_hbm [thread:$0]  %s403, 128, %s3, [#allocation4]
    $region29: #{fwd.1} parent=1 // pred_fallthru
      _
    // Predicated region
    $region30: #{fwd.1} parent=1 // pred_check
      _
    $region31: #{fwd.1} parent=1 // pred_check_branch
      %407 = sbr.rel (0) target = $region33
    $region32: #{fwd.1} parent=1 // pred_region
      %408 = dma.done [#allocation4], 128
    $region33: #{fwd.1} parent=1 // pred_fallthru
      _
    %409 = vsyncpa [#allocation3], 1
    %410 = vsyncpa [#allocation6], 1
    %411 = vsyncpa [#allocation4], 1

</llo_original>
